<compile_context>
chip_gen: v6e
topology: v6e:2x2x1
jax: 0.10.0
libtpu: 0.0.40
codegen_flags: <defaults>
</compile_context>

<pallas_src>
import functools

import jax
import jax.numpy as jnp
from jax.experimental import pallas as pl
from jax.experimental.pallas import tpu as pltpu


def _rsr1_kernel(hr_ref, h_ref, out_ref, *, tile_m, hw, mask_cols):
    # hr_ref, h_ref: (C, TM) tile in VMEM ; out_ref: (1, 128) partial-sum block.
    d = hr_ref[...].astype(jnp.float32) - h_ref[...].astype(jnp.float32)  # (C, TM)

    if mask_cols:
        # Ragged last tile: zero out-of-range columns *before* square/sqrt so
        # they contribute exactly 0 to the sum (garbage reads are discarded).
        col = pl.program_id(1) * tile_m + jax.lax.broadcasted_iota(
            jnp.int32, d.shape, 1
        )
        d = jnp.where(col < hw, d, 0.0)

    sq = jnp.sum(d * d, axis=0, keepdims=True)  # (1, TM)  sum over channel
    norms = jnp.sqrt(sq)                        # (1, TM)  per-position L2 norm
    # Fold TM lanes -> 128 lanes (lane-dense partial sums, no per-step scalar
    # cross-lane reduce); the final reduction happens outside the kernel.
    out_ref[...] = jnp.sum(
        norms.reshape(tile_m // 128, 128), axis=0, keepdims=True
    )  # (1, 128)


def _choose_tile_m(c, hw, itemsize, vmem_budget_bytes):
    # Sublane packing: f32 -> 8 rows/vreg, bf16 -> 16 (account for padding when
    # C is small so the VMEM estimate is not a surprise underestimate).
    sublane = 8 * max(1, 4 // itemsize)
    c_pad = ((c + sublane - 1) // sublane) * sublane
    # 2 inputs x 2 pipeline buffers of (c_pad, TM) each.
    per_lane_bytes = 4 * c_pad * itemsize
    tm = vmem_budget_bytes // per_lane_bytes
    tm = (tm // 128) * 128
    tm = max(128, min(tm, 8192))
    # No point tiling wider than the (128-padded) row length.
    hw_pad = ((hw + 127) // 128) * 128
    return min(tm, hw_pad)


def rsr1_loss(hr, h, *, tile_m=None, vmem_budget_bytes=12 * 1024 * 1024):
    """Pallas equivalent of RSR1Loss()(hr, h) for NCHW inputs."""
    assert hr.shape == h.shape and hr.ndim == 4
    n, c, hh, ww = hr.shape
    hw = hh * ww

    # Free, contiguous view -- no transpose, no extra HBM traffic.
    hr3 = hr.reshape(n, c, hw)
    h3 = h.reshape(n, c, hw)

    itemsize = jnp.dtype(hr.dtype).itemsize
    if tile_m is None:
        tile_m = _choose_tile_m(c, hw, itemsize, vmem_budget_bytes)
    assert tile_m % 128 == 0

    num_tiles = pl.cdiv(hw, tile_m)
    mask_cols = (hw % tile_m) != 0

    kernel = functools.partial(
        _rsr1_kernel, tile_m=tile_m, hw=hw, mask_cols=mask_cols
    )

    out = pl.pallas_call(
        kernel,
        out_shape=jax.ShapeDtypeStruct((n * num_tiles, 1, 128), jnp.float32),
        grid_spec=pltpu.PrefetchScalarGridSpec(
            num_scalar_prefetch=0,
            grid=(n, num_tiles),
            in_specs=[
                pl.BlockSpec((None, c, tile_m), lambda b, i: (b, 0, i)),
                pl.BlockSpec((None, c, tile_m), lambda b, i: (b, 0, i)),
            ],
            # One distinct (1, 128) partial-sum block per grid step -> no
            # resident accumulator, both grid axes can be parallel (v7x cores).
            out_specs=pl.BlockSpec(
                (None, 1, 128), lambda b, i: (b * num_tiles + i, 0, 0)
            ),
        ),
        compiler_params=pltpu.CompilerParams(
            dimension_semantics=("parallel", "parallel"),
            vmem_limit_bytes=32 * 1024 * 1024,
        ),
    )(hr3, h3)

    # Tiny final reduction over (n * num_tiles, 1, 128) partial sums.
    return jnp.sum(out)


def rsr1_loss_ref(hr, h):
    # Pure-JAX reference matching torch semantics.
    d = hr.astype(jnp.float32) - h.astype(jnp.float32)
    norms = jnp.sqrt(jnp.sum(d * d, axis=1))  # norm over dim=1 (channel)
    return jnp.sum(norms)


if __name__ == "__main__":
    key = jax.random.PRNGKey(0)
    k1, k2 = jax.random.split(key)

    # Small NCHW shapes: batch=2, channels=4, spatial=16x16.
    hr = jax.random.normal(k1, (2, 4, 16, 16), dtype=jnp.float32)
    h = jax.random.normal(k2, (2, 4, 16, 16), dtype=jnp.float32)

    out = rsr1_loss(hr, h)
    out = jax.block_until_ready(out)

    ref = rsr1_loss_ref(hr, h)
    assert jnp.allclose(out, ref, rtol=1e-5, atol=1e-5), (out, ref)

    print("KERNEL_OK")
</pallas_src>

<mosaic_0001>
module attributes {stable_mosaic.version = 11 : i64} {
  func.func @_rsr1_kernel(%arg0: i32, %arg1: i32, %arg2: memref<1x4x256xf32, #tpu.memory_space<vmem>>, %arg3: memref<1x4x256xf32, #tpu.memory_space<vmem>>, %arg4: memref<1x1x128xf32, #tpu.memory_space<vmem>>) attributes {dimension_semantics = [#tpu.dimension_semantics<parallel>, #tpu.dimension_semantics<parallel>], iteration_bounds = array<i64: 2, 1>, scalar_prefetch = 0 : i64, scratch_operands = 0 : i64, tpu.core_type = #tpu.core_type<tc>, window_params = [{transform_indices = @transform_0, window_bounds = array<i64: 1, 4, 256>}, {transform_indices = @transform_1, window_bounds = array<i64: 1, 4, 256>}, {transform_indices = @transform_2, window_bounds = array<i64: 1, 1, 128>}]} {
    %c0 = arith.constant 0 : index
    %c0_0 = arith.constant 0 : index
    %c0_1 = arith.constant 0 : index
    %0 = vector.load %arg2[%c0, %c0_0, %c0_1] : memref<1x4x256xf32, #tpu.memory_space<vmem>>, vector<1x4x256xf32>
    %1 = vector.shape_cast %0 : vector<1x4x256xf32> to vector<4x256xf32>
    %c0_2 = arith.constant 0 : index
    %c0_3 = arith.constant 0 : index
    %c0_4 = arith.constant 0 : index
    %2 = vector.load %arg3[%c0_2, %c0_3, %c0_4] : memref<1x4x256xf32, #tpu.memory_space<vmem>>, vector<1x4x256xf32>
    %3 = vector.shape_cast %2 : vector<1x4x256xf32> to vector<4x256xf32>
    %4 = arith.subf %1, %3 : vector<4x256xf32>
    %5 = arith.mulf %4, %4 : vector<4x256xf32>
    %cst = arith.constant dense<0.000000e+00> : vector<256xf32>
    %6 = vector.multi_reduction <add>, %5, %cst [0] : vector<4x256xf32> to vector<256xf32>
    %7 = vector.shape_cast %6 : vector<256xf32> to vector<1x256xf32>
    %8 = math.sqrt %7 : vector<1x256xf32>
    %9 = vector.shape_cast %8 : vector<1x256xf32> to vector<2x128xf32>
    %cst_5 = arith.constant dense<0.000000e+00> : vector<128xf32>
    %10 = vector.multi_reduction <add>, %9, %cst_5 [0] : vector<2x128xf32> to vector<128xf32>
    %11 = vector.shape_cast %10 : vector<128xf32> to vector<1x128xf32>
    %c0_6 = arith.constant 0 : index
    %c0_7 = arith.constant 0 : index
    %c0_8 = arith.constant 0 : index
    %12 = vector.load %arg4[%c0_6, %c0_7, %c0_8] : memref<1x1x128xf32, #tpu.memory_space<vmem>>, vector<1x1x128xf32>
    %13 = vector.shape_cast %12 : vector<1x1x128xf32> to vector<1x128xf32>
    %14 = vector.shape_cast %11 : vector<1x128xf32> to vector<1x1x128xf32>
    tpu.vector_store %arg4[%c0_6, %c0_7, %c0_8], %14 {strides = array<i32>} : memref<1x1x128xf32, #tpu.memory_space<vmem>>, vector<1x1x128xf32>,
    return
  }
  func.func @transform_0(%arg0: i32, %arg1: i32) -> (i32, i32, i32) {
    %c0_i32 = arith.constant 0 : i32
    %c0_i32_0 = arith.constant 0 : i32
    return %arg0, %c0_i32, %arg1 : i32, i32, i32
  }
  func.func @transform_1(%arg0: i32, %arg1: i32) -> (i32, i32, i32) {
    %c0_i32 = arith.constant 0 : i32
    %c0_i32_0 = arith.constant 0 : i32
    return %arg0, %c0_i32, %arg1 : i32, i32, i32
  }
  func.func @transform_2(%arg0: i32, %arg1: i32) -> (i32, i32, i32) {
    %c1_i32 = arith.constant 1 : i32
    %0 = arith.muli %arg0, %c1_i32 : i32
    %1 = arith.addi %0, %arg1 : i32
    %c0_i32 = arith.constant 0 : i32
    %c0_i32_0 = arith.constant 0 : i32
    %c0_i32_1 = arith.constant 0 : i32
    return %1, %c0_i32, %c0_i32_0 : i32, i32, i32
  }
}

</mosaic_0001>

<llo_original>
// kernel: tpu_custom_call.1
$region0: #{tpu_custom_call.1}
  #allocation0 [shape = 'u32[]', space=smem, size = 0x4, offset = 0x4, fixed_abs, tag = 'smem constant byte address 0x4 - core index']
  #allocation1 [shape = 'u32[144,128]{1,0:T(1,128)}', space=vmem, size = 0x12000, scoped, tag = 'internal scratch']
  %s0 = inlined_call_operand.hbm [shape: f32[2,4,256], index: 0, kind: input, shape index: {}]
  %s1 = inlined_call_operand.hbm [shape: f32[2,4,256], index: 1, kind: input, shape index: {}]
  %s2 = inlined_call_operand.hbm [shape: f32[2,1,128], index: 2, kind: output, shape index: {}]
  %s3 = sld [smem:[#allocation0]]
  $region49: #{tpu_custom_call.1} parent=0
    _
  %s5 = ssub.s32 1, %s3
  %s6 = scalar_select 0, %s5, %s3
  $region1: #{tpu_custom_call.1} parent=0
    #allocation2 [shape = 'u8[8192]{0}', space=vmem, size = 0x2000, scoped, tag = 'input window, operand 0']
    #allocation3 [shape = 's32[2]{0}', space=sflag, size = 0x8, scoped, tag = 'scoped memory for tpu_custom_call.1']
    #allocation4 [shape = 's32[2]{0}', space=sflag, size = 0x8, scoped, tag = 'scoped memory for tpu_custom_call.1']
    #allocation5 [shape = 'u8[8192]{0}', space=vmem, size = 0x2000, scoped, tag = 'input window, operand 1']
    #allocation6 [shape = 's32[2]{0}', space=sflag, size = 0x8, scoped, tag = 'scoped memory for tpu_custom_call.1']
    #allocation7 [shape = 'u8[1024]{0}', space=vmem, size = 0x400, scoped, tag = 'output window, operand 0']
    %7 = vsyncpa [#allocation3], 0
    %s8 = scalar_lea.sflag [#allocation3], 1
    %9 = vsyncpa %s8, 0
    %10 = vsyncpa [#allocation6], 0
    %s11 = scalar_lea.sflag [#allocation6], 1
    %12 = vsyncpa %s11, 0
    %13 = vsyncpa [#allocation4], 0
    %s14 = scalar_lea.sflag [#allocation4], 1
    %15 = vsyncpa %s14, 0
    loop: start=0, step=1, limit=4
    $region2: #{tpu_custom_call.1} parent=1 // loop_pre_header
      _
    $region3: #{tpu_custom_call.1} parent=1 // loop_header
      %s17 = sphi 0, %s21
      %p18 = scmp.ge.s32.totalorder %s17, 4
      %s24 = sphi 0, %s36
      %s25 = sphi 0, %s32
      %s26 = sphi 0, %s24
      %s27 = sphi 0, %s25
      %s28 = sphi 0, %s26
      %s29 = sphi 0, %s27
      %s41 = sphi 0, %s43
      %s44 = sphi 0, %s41
      %s45 = sphi 0, %s44
      %s61 = sphi 0, %s45
      %s69 = sphi 0, %s71
      %s72 = sphi 0, %s69
      %s73 = sphi 0, %s72
      %s89 = sphi 0, %s73
      %s97 = sphi 0, %s99
      %s100 = sphi 0, %s97
      %s101 = sphi 0, %s100
      %s117 = sphi 0, %s101
    $region4: #{tpu_custom_call.1} parent=1 // loop_header_branch
      %20 = sbr.rel (%p18) target = $region8
    $region5: #{tpu_custom_call.1} parent=1 // loop_body
      %s22 = ssub.s32 %s17, 1
      %s23 = ssub.s32 %s17, 2
      %s30 = sadd.s32 1, %s25
      %p31 = scmp.ge.s32.totalorder %s30, 1
      %s32 = scalar_select %p31, 0, %s30
      %s33 = sadd.s32 1, %s24
      %s34 = scalar_select %p31, %s33, %s24
      %p35 = scmp.ge.s32.totalorder %s34, 2
      %s36 = scalar_select %p35, 0, %s34
      %s37 = ssub.s32 %s24, %s36
      %s38 = ssub.s32 %s25, %s32
      %s39 = sor.u32 %s37, %s38
      %p40 = scmp.eq.s32.totalorder %s39, 0
      %s42 = sadd.s32 %s41, 1
      %s43 = scalar_select %p40, %s41, %s42
      %p46 = pneg %p40
      %p47 = scmp.eq.s32.totalorder %s17, 1
      %p48 = por %p46, %p47
      %p49 = scmp.ne.s32.totalorder %s41, %s44
      %p50 = scmp.eq.s32.totalorder %s17, 0
      %p51 = por %p49, %p50
      %p52 = scmp.ne.s32.totalorder %s41, %s44
      %p53 = scmp.eq.s32.totalorder %s22, 1
      %p54 = por %p52, %p53
      %p55 = scmp.ne.s32.totalorder %s44, %s45
      %p56 = scmp.eq.s32.totalorder %s22, 0
      %p57 = por %p55, %p56
      %p58 = scmp.ne.s32.totalorder %s44, %s45
      %p59 = scmp.eq.s32.totalorder %s23, 1
      %p60 = por %p58, %p59
      %p62 = scmp.ne.s32.totalorder %s45, %s61
      %p63 = scmp.eq.s32.totalorder %s23, 0
      %p64 = por %p62, %p63
      %s65 = ssub.s32 %s24, %s36
      %s66 = ssub.s32 %s25, %s32
      %s67 = sor.u32 %s65, %s66
      %p68 = scmp.eq.s32.totalorder %s67, 0
      %s70 = sadd.s32 %s69, 1
      %s71 = scalar_select %p68, %s69, %s70
      %p74 = pneg %p68
      %p75 = scmp.eq.s32.totalorder %s17, 1
      %p76 = por %p74, %p75
      %p77 = scmp.ne.s32.totalorder %s69, %s72
      %p78 = scmp.eq.s32.totalorder %s17, 0
      %p79 = por %p77, %p78
      %p80 = scmp.ne.s32.totalorder %s69, %s72
      %p81 = scmp.eq.s32.totalorder %s22, 1
      %p82 = por %p80, %p81
      %p83 = scmp.ne.s32.totalorder %s72, %s73
      %p84 = scmp.eq.s32.totalorder %s22, 0
      %p85 = por %p83, %p84
      %p86 = scmp.ne.s32.totalorder %s72, %s73
      %p87 = scmp.eq.s32.totalorder %s23, 1
      %p88 = por %p86, %p87
      %p90 = scmp.ne.s32.totalorder %s73, %s89
      %p91 = scmp.eq.s32.totalorder %s23, 0
      %p92 = por %p90, %p91
      %s93 = sadd.s32 %s24, %s25
      %s94 = sadd.s32 %s36, %s32
      %s95 = ssub.s32 %s93, %s94
      %p96 = scmp.eq.s32.totalorder %s95, 0
      %s98 = sadd.s32 %s97, 1
      %s99 = scalar_select %p96, %s97, %s98
      %p102 = pneg %p96
      %p103 = scmp.eq.s32.totalorder %s17, 1
      %p104 = por %p102, %p103
      %p105 = scmp.ne.s32.totalorder %s97, %s100
      %p106 = scmp.eq.s32.totalorder %s17, 0
      %p107 = por %p105, %p106
      %p108 = scmp.ne.s32.totalorder %s97, %s100
      %p109 = scmp.eq.s32.totalorder %s22, 1
      %p110 = por %p108, %p109
      %p111 = scmp.ne.s32.totalorder %s100, %s101
      %p112 = scmp.eq.s32.totalorder %s22, 0
      %p113 = por %p111, %p112
      %p114 = scmp.ne.s32.totalorder %s100, %s101
      %p115 = scmp.eq.s32.totalorder %s23, 1
      %p116 = por %p114, %p115
      %p118 = scmp.ne.s32.totalorder %s101, %s117
      %p119 = scmp.eq.s32.totalorder %s23, 0
      %p120 = por %p118, %p119
      %p121 = scmp.le.s32.totalorder 1, %s17
      %p122 = scmp.lt.s32.totalorder %s17, 3
      %p123 = pnand %p121, %p122
      %p124 = pneg %p123
      // Predicated region
      $region9: #{tpu_custom_call.1} parent=5 // pred_check
        _
      $region10: #{tpu_custom_call.1} parent=5 // pred_check_branch
        %126 = sbr.rel (%p123) target = $region12
      $region11: #{tpu_custom_call.1} parent=5 // pred_region
        %s127 = ssub.s32 %s17, 1
      $region12: #{tpu_custom_call.1} parent=5 // pred_fallthru
        _
      %p128 = scmp.lt.s32.totalorder %s17, 2
      // Predicated region
      $region13: #{tpu_custom_call.1} parent=5 // pred_check
        %p129 = pneg %p128
      $region14: #{tpu_custom_call.1} parent=5 // pred_check_branch
        %131 = sbr.rel (%p129) target = $region16
      $region15: #{tpu_custom_call.1} parent=5 // pred_region
        // Predicated region
        $region17: #{tpu_custom_call.1} parent=15 // pred_check
          %p132 = pneg %p51
        $region18: #{tpu_custom_call.1} parent=15 // pred_check_branch
          %134 = sbr.rel (%p132) target = $region20
        $region19: #{tpu_custom_call.1} parent=15 // pred_region
          %s135 = sand.u32 %s41, 1
          %s136 = scalar_lea.sflag [#allocation3], %s135
          %s137 = sand.u32 %s41, 1
          %s138 = smul.addr %s137, 8
          %s139 = scalar_lea.vmem [#allocation2], %s138
          %s140 = smul.u32 2, %s25
          %s142 = ssub.s32 128, 128
          %143 = vsyncadd %s136, %s142
          %s144 = smul.addr %s24, 2
          %s145 = sadd.s32 %s140, %s144
          %s146 = smul.addr %s145, 64
          %s147 = scalar_lea.hbm %s0, %s146
          %s149 = sshll.u32 %s139, 4
          %s150 = int_to_ptr.vmem [resolvable:$true] %s149
          %152 = dma.hbm_to_vmem [thread:$0]  %s147, 128, %s150, %s136
        $region20: #{tpu_custom_call.1} parent=15 // pred_fallthru
          _
        // Predicated region
        $region21: #{tpu_custom_call.1} parent=15 // pred_check
          %p153 = pneg %p79
        $region22: #{tpu_custom_call.1} parent=15 // pred_check_branch
          %155 = sbr.rel (%p153) target = $region24
        $region23: #{tpu_custom_call.1} parent=15 // pred_region
          %s156 = sand.u32 %s69, 1
          %s157 = scalar_lea.sflag [#allocation6], %s156
          %s158 = sand.u32 %s69, 1
          %s159 = smul.addr %s158, 8
          %s160 = scalar_lea.vmem [#allocation5], %s159
          %s161 = smul.u32 2, %s25
          %s163 = ssub.s32 128, 128
          %164 = vsyncadd %s157, %s163
          %s165 = smul.addr %s24, 2
          %s166 = sadd.s32 %s161, %s165
          %s167 = smul.addr %s166, 64
          %s168 = scalar_lea.hbm %s1, %s167
          %s170 = sshll.u32 %s160, 4
          %s171 = int_to_ptr.vmem [resolvable:$true] %s170
          %173 = dma.hbm_to_vmem [thread:$0]  %s168, 128, %s171, %s157
        $region24: #{tpu_custom_call.1} parent=15 // pred_fallthru
          _
      $region16: #{tpu_custom_call.1} parent=5 // pred_fallthru
        _
      %p174 = scmp.le.s32.totalorder 1, %s17
      %p175 = scmp.lt.s32.totalorder %s17, 3
      %p176 = pnand %p174, %p175
      %p177 = pneg %p176
      // Predicated region
      $region25: #{tpu_custom_call.1} parent=5 // pred_check
        _
      $region26: #{tpu_custom_call.1} parent=5 // pred_check_branch
        %179 = sbr.rel (%p176) target = $region28
      $region27: #{tpu_custom_call.1} parent=5 // pred_region
        %s180 = ssub.s32 %s17, 1
        %s181 = sand.u32 %s44, 1
        %s182 = scalar_lea.sflag [#allocation3], %s181
        %s183 = sand.u32 %s44, 1
        %s184 = smul.addr %s183, 8
        %s185 = scalar_lea.vmem [#allocation2], %s184
        // Predicated region
        $region29: #{tpu_custom_call.1} parent=27 // pred_check
          %p186 = pneg %p57
        $region30: #{tpu_custom_call.1} parent=27 // pred_check_branch
          %188 = sbr.rel (%p186) target = $region32
        $region31: #{tpu_custom_call.1} parent=27 // pred_region
          %189 = dma.done %s182, 128
        $region32: #{tpu_custom_call.1} parent=27 // pred_fallthru
          _
        %s190 = sand.u32 %s72, 1
        %s191 = scalar_lea.sflag [#allocation6], %s190
        %s192 = sand.u32 %s72, 1
        %s193 = smul.addr %s192, 8
        %s194 = scalar_lea.vmem [#allocation5], %s193
        // Predicated region
        $region33: #{tpu_custom_call.1} parent=27 // pred_check
          %p195 = pneg %p85
        $region34: #{tpu_custom_call.1} parent=27 // pred_check_branch
          %197 = sbr.rel (%p195) target = $region36
        $region35: #{tpu_custom_call.1} parent=27 // pred_region
          %198 = dma.done %s191, 128
        $region36: #{tpu_custom_call.1} parent=27 // pred_fallthru
          _
        %s199 = sand.u32 %s44, 1
        %s200 = scalar_lea.sflag [#allocation3], %s199
        %s201 = sand.u32 %s44, 1
        %s202 = smul.addr %s201, 8
        %s203 = scalar_lea.vmem [#allocation2], %s202
        %p204 = pneg %p57
        %p205 = pneg %p54
        %s206 = sand.u32 %s72, 1
        %s207 = scalar_lea.sflag [#allocation6], %s206
        %s208 = sand.u32 %s72, 1
        %s209 = smul.addr %s208, 8
        %s210 = scalar_lea.vmem [#allocation5], %s209
        %p211 = pneg %p85
        %p212 = pneg %p82
        %p213 = pneg %p113
        %p214 = pneg %p110
        %s215 = sand.u32 %s100, 1
        %s216 = scalar_lea.sflag [#allocation4], %s215
        %s217 = sand.u32 %s100, 1
        %s218 = scalar_lea.vmem [#allocation7], %s217
        %s219 = smul.u32 2, %s27
        %s220 = smul.u32 2, %s27
        %s221 = sadd.s32 %s26, %s27
        %v222 = vld [vmem:[%s185] sm:$0xff]
        %v223 = vld [vmem:[%s194] sm:$0xff]
        %v224 = vsub.f32 %v222, %v223
        %v225 = vmul.f32 %v224, %v224
        %v227 = vcombine.high %v225, %v225
        %vm229 = vcmask 1043456
        %v230 = vsel %vm229, %v225, 0.0
        %v231 = vrot.slane %v230, 4
        %v232 = vadd.f32 %v230, %v231
        %v233 = vrot.slane %v232, 2
        %v234 = vadd.f32 %v232, %v233
        %v235 = vrot.slane %v234, 1
        %v236 = vadd.f32 %v234, %v235
        %v237 = vsel %vm229, %v227, 0.0
        %v238 = vrot.slane %v237, 4
        %v239 = vadd.f32 %v237, %v238
        %v240 = vrot.slane %v239, 2
        %v241 = vadd.f32 %v239, %v240
        %v242 = vrot.slane %v241, 1
        %v243 = vadd.f32 %v241, %v242
        %v244 = vrsqrt.pop %v236
        %v245 = vmul.f32 %v236, %v244
        %vm246 = vcmp.eq.f32.partialorder %v236, inf
        %v247 = vsel %vm246, %v236, %v245
        %vm248 = vcmp.eq.f32.partialorder %v236, 0.0
        %v249 = vand.u32 %v236, 2147483648
        %v250 = vsel %vm248, %v249, %v247
        %v251 = vrsqrt.pop %v243
        %v252 = vmul.f32 %v243, %v251
        %vm253 = vcmp.eq.f32.partialorder %v243, inf
        %v254 = vsel %vm253, %v243, %v252
        %vm255 = vcmp.eq.f32.partialorder %v243, 0.0
        %v256 = vand.u32 %v243, 2147483648
        %v257 = vsel %vm255, %v256, %v254
        %v260 = vcombine.low %v250, %v257
        %v263 = vunpack.c.l.s4 1935823168
        %v264 = vunpack.c.0.s8 %v263
        %v265 = vlaneseq
        %v266 = vshrl.u32 %v265, 7
        %v267 = vsub.s32 %v264, %v266
        %v268 = vrot.slane %v260, %v267
        %vm269 = vcmask 1041408
        %v270 = vsel %vm269, %v268, 0.0
        %v271 = vrot.slane %v270, 4
        %v272 = vadd.f32 %v270, %v271
        %v273 = vrot.slane %v272, 2
        %v274 = vadd.f32 %v272, %v273
        %v275 = vrot.slane %v274, 1
        %v276 = vadd.f32 %v274, %v275
        %277 = vst [vmem:[%s218] sm:$0x1] %v276
        %s278 = sand.u32 %s100, 1
        %s279 = scalar_lea.sflag [#allocation4], %s278
        %s280 = sand.u32 %s100, 1
        %s281 = scalar_lea.vmem [#allocation7], %s280
        // Predicated region
        $region37: #{tpu_custom_call.1} parent=27 // pred_check
          %p282 = pneg %p110
        $region38: #{tpu_custom_call.1} parent=27 // pred_check_branch
          %284 = sbr.rel (%p282) target = $region40
        $region39: #{tpu_custom_call.1} parent=27 // pred_region
          %s285 = sadd.s32 %s26, %s27
          %s287 = ssub.s32 16, 16
          %288 = vsyncadd %s279, %s287
          %s289 = smul.addr %s285, 16
          %s290 = scalar_lea.hbm %s2, %s289
          %s292 = sshll.u32 %s281, 4
          %s293 = int_to_ptr.vmem [resolvable:$true] %s292
          %295 = dma.vmem_to_hbm [thread:$0]  %s293, 16, %s290, %s279
        $region40: #{tpu_custom_call.1} parent=27 // pred_fallthru
          _
      $region28: #{tpu_custom_call.1} parent=5 // pred_fallthru
        _
      %p296 = scmp.le.s32.totalorder 2, %s17
      // Predicated region
      $region41: #{tpu_custom_call.1} parent=5 // pred_check
        %p297 = pneg %p296
      $region42: #{tpu_custom_call.1} parent=5 // pred_check_branch
        %299 = sbr.rel (%p297) target = $region44
      $region43: #{tpu_custom_call.1} parent=5 // pred_region
        %s300 = ssub.s32 %s17, 2
        // Predicated region
        $region45: #{tpu_custom_call.1} parent=43 // pred_check
          %p301 = pneg %p116
        $region46: #{tpu_custom_call.1} parent=43 // pred_check_branch
          %303 = sbr.rel (%p301) target = $region48
        $region47: #{tpu_custom_call.1} parent=43 // pred_region
          %s304 = sand.u32 %s101, 1
          %s305 = scalar_lea.sflag [#allocation4], %s304
          %s306 = sand.u32 %s101, 1
          %s307 = scalar_lea.vmem [#allocation7], %s306
          %308 = dma.done %s305, 16
        $region48: #{tpu_custom_call.1} parent=43 // pred_fallthru
          _
      $region44: #{tpu_custom_call.1} parent=5 // pred_fallthru
        _
    $region6: #{tpu_custom_call.1} parent=1 // loop_footer
      %s21 = sadd.s32 1, %s17
    $region7: #{tpu_custom_call.1} parent=1 // loop_footer_branch
      %16 = sbr.rel target = $region3
    $region8: #{tpu_custom_call.1} parent=1 // loop_exit
      _
    %309 = vsyncpa [#allocation3], 1
    %s310 = scalar_lea.sflag [#allocation3], 1
    %311 = vsyncpa %s310, 1
    %312 = vsyncpa [#allocation6], 1
    %s313 = scalar_lea.sflag [#allocation6], 1
    %314 = vsyncpa %s313, 1
    %315 = vsyncpa [#allocation4], 1
    %s316 = scalar_lea.sflag [#allocation4], 1
    %317 = vsyncpa %s316, 1

</llo_original>
